<compile_context>
chip_gen: v6e
topology: v6e:2x2x1
jax: 0.10.0
libtpu: 0.0.40
codegen_flags: <defaults>
</compile_context>

<pallas_src>
import functools

import jax
import jax.numpy as jnp
import numpy as np
from jax.experimental import pallas as pl
from jax.experimental.pallas import tpu as pltpu


def _calm_kernel(inv_t,
                 x_ref, cov_ref, logit_ref, oh_ref,
                 enc_w_ref, enc_b_ref, dec_w_ref, dec_b_ref,
                 w1a_ref, w1b_ref, b1_ref, w2_ref, b2_ref, eb_ref,
                 hw1_ref, hb1_ref, hw2_ref, hb2_ref, eh_ref,
                 final_ref, ae_ref):
    f32 = jnp.float32
    x = x_ref[...]
    cov = cov_ref[...]

    # --- autoencoder: encoder Linear+ReLU -> bottleneck, decoder Linear ---
    bottle = jnp.maximum(
        jnp.dot(x, enc_w_ref[...], preferred_element_type=f32) + enc_b_ref[...],
        0.0)
    ae_out = (jnp.dot(bottle, dec_w_ref[...], preferred_element_type=f32)
              + dec_b_ref[...])

    # --- branching: softmax(log(p_id) / t) over branches (eps = 0 at eval) ---
    z = logit_ref[...] * inv_t
    z = z - jnp.max(z, axis=1, keepdims=True)
    e = jnp.exp(z)
    probs = e * pl.reciprocal(jnp.sum(e, axis=1, keepdims=True), approx=True)

    # --- branch_layer: all branches packed along the lane axis ---
    # h1 columns are [branch0 | branch1 | ...]; covariate concat is a split
    # matmul against the packed W1a / W1b (identical to [bottle|cov] @ vstack).
    h1 = jnp.maximum(
        jnp.dot(bottle, w1a_ref[...], preferred_element_type=f32)
        + jnp.dot(cov, w1b_ref[...], preferred_element_type=f32)
        + b1_ref[...],
        0.0)                                                    # (TB, nb*sh)
    probs_rep = jnp.dot(probs, eb_ref[...], preferred_element_type=f32)
    branch_out = (jnp.dot(probs_rep * h1, w2_ref[...], preferred_element_type=f32)
                  + jnp.dot(probs, b2_ref[...], preferred_element_type=f32))

    # --- out_heads: all heads packed along the lane axis, one-hot select ---
    oh = oh_ref[...]
    h2 = jnp.maximum(
        jnp.dot(branch_out, hw1_ref[...], preferred_element_type=f32)
        + hb1_ref[...],
        0.0)                                                    # (TB, nh*hh)
    oh_rep = jnp.dot(oh, eh_ref[...], preferred_element_type=f32)
    final = (jnp.dot(oh_rep * h2, hw2_ref[...], preferred_element_type=f32)
             + jnp.dot(oh, hb2_ref[...], preferred_element_type=f32))

    # Stores last (decoder result kept off the critical path into the heads).
    final_ref[...] = final
    ae_ref[...] = ae_out


def _round_up(a, m):
    return (a + m - 1) // m * m


@functools.partial(jax.jit, static_argnames=("temperature",))
def calm_forward(x, cov, branch_logits, head_oh, weights, temperature=1.0):
    (enc_w, enc_b, dec_w, dec_b,
     br_w1a, br_w1b, br_b1, br_w2, br_b2,
     hd_w1, hd_b1, hd_w2, hd_b2) = weights

    f32 = jnp.float32
    B, in_size = x.shape
    cov_size = cov.shape[1]
    nb, ae_h, sh = br_w1a.shape
    bo = br_w2.shape[-1]
    nh, _, hh = hd_w1.shape
    nc = hd_w2.shape[-1]

    # ---- lane-dense weight packing (branches / heads along the lane axis) ----
    w1a_p = jnp.transpose(br_w1a, (1, 0, 2)).reshape(ae_h, nb * sh)
    w1b_p = jnp.transpose(br_w1b, (1, 0, 2)).reshape(cov_size, nb * sh)
    b1_p = br_b1.reshape(1, nb * sh)
    w2_s = br_w2.reshape(nb * sh, bo)
    b2_s = br_b2.reshape(nb, bo)
    e_b = jnp.kron(jnp.eye(nb, dtype=f32), jnp.ones((1, sh), f32))   # (nb, nb*sh)

    hw1_p = jnp.transpose(hd_w1, (1, 0, 2)).reshape(bo, nh * hh)
    hb1_p = hd_b1.reshape(1, nh * hh)
    hw2_s = hd_w2.reshape(nh * hh, nc)
    hb2_s = hd_b2.reshape(nh, nc)
    e_h = jnp.kron(jnp.eye(nh, dtype=f32), jnp.ones((1, hh), f32))   # (nh, nh*hh)

    # ---- batch tiling (parallel grid); small batches run as a single tile ----
    # Per-row footprint is ~200 bytes, so a 512-row tile costs ~100 KiB of VMEM
    # and mostly amortizes the per-grid-step overhead for big batches.
    tile_b = 512 if B > 512 else _round_up(B, 8)
    padded_b = _round_up(B, tile_b)
    pad = padded_b - B
    if pad:
        x = jnp.pad(x, ((0, pad), (0, 0)))
        cov = jnp.pad(cov, ((0, pad), (0, 0)))
        branch_logits = jnp.pad(branch_logits, ((0, pad), (0, 0)))
        head_oh = jnp.pad(head_oh, ((0, pad), (0, 0)))
    num_tiles = padded_b // tile_b

    def row_spec(width):
        return pl.BlockSpec((tile_b, width), lambda i: (i, 0))

    def full_spec(a):
        return pl.BlockSpec(a.shape, lambda i: (0, 0))

    weight_slabs = (enc_w, enc_b, dec_w, dec_b,
                    w1a_p, w1b_p, b1_p, w2_s, b2_s, e_b,
                    hw1_p, hb1_p, hw2_s, hb2_s, e_h)

    in_specs = ([row_spec(in_size), row_spec(cov_size),
                 row_spec(nb), row_spec(nh)]
                + [full_spec(a) for a in weight_slabs])
    out_specs = (pl.BlockSpec((tile_b, nc), lambda i: (i, 0)),
                 pl.BlockSpec((tile_b, in_size), lambda i: (i, 0)))

    flops = 2 * padded_b * (in_size * ae_h + ae_h * in_size
                            + (ae_h + cov_size) * nb * sh + nb * sh * bo
                            + bo * nh * hh + nh * hh * nc
                            + nb * (nb * sh + bo) + nh * (nh * hh + nc))
    bytes_accessed = 4 * (padded_b * (in_size + cov_size + nb + nh + nc + in_size)
                          + sum(int(np.prod(a.shape)) for a in weight_slabs))
    cost = pl.CostEstimate(flops=int(flops),
                           transcendentals=int(padded_b * (nb + 1)),
                           bytes_accessed=int(bytes_accessed))

    kernel = functools.partial(_calm_kernel, float(1.0 / temperature))
    final_pad, ae_pad = pl.pallas_call(
        kernel,
        grid=(num_tiles,),
        out_shape=(jax.ShapeDtypeStruct((padded_b, nc), f32),
                   jax.ShapeDtypeStruct((padded_b, in_size), f32)),
        in_specs=in_specs,
        out_specs=out_specs,
        compiler_params=pltpu.CompilerParams(
            dimension_semantics=("parallel",)),
        cost_estimate=cost,
    )(x, cov, branch_logits, head_oh, *weight_slabs)

    return final_pad[:B], ae_pad[:B]


def calm_forward_ref(x, cov, branch_logits, head_oh, weights, temperature=1.0):
    """Pure-JAX reference for correctness checking."""
    (enc_w, enc_b, dec_w, dec_b,
     br_w1a, br_w1b, br_b1, br_w2, br_b2,
     hd_w1, hd_b1, hd_w2, hd_b2) = weights
    bottle = jnp.maximum(x @ enc_w + enc_b, 0.0)
    ae_out = bottle @ dec_w + dec_b
    probs = jax.nn.softmax(branch_logits / temperature, axis=1)
    branch_out = jnp.zeros((x.shape[0], br_b2.shape[-1]), jnp.float32)
    for b in range(br_w1a.shape[0]):
        h = jnp.maximum(bottle @ br_w1a[b] + cov @ br_w1b[b] + br_b1[b], 0.0)
        branch_out = branch_out + probs[:, b:b + 1] * (h @ br_w2[b] + br_b2[b])
    final = jnp.zeros((x.shape[0], hd_b2.shape[-1]), jnp.float32)
    for g in range(hd_w1.shape[0]):
        h = jnp.maximum(branch_out @ hd_w1[g] + hd_b1[g], 0.0)
        final = final + head_oh[:, g:g + 1] * (h @ hd_w2[g] + hd_b2[g])
    return final, ae_out


if __name__ == "__main__":
    # Small shapes consistent with the module's params dict.
    B = 8
    in_size = 16            # params['in_size']
    ae_hidden = 32          # params['AE_hidden_size']  == bottle_neck width
    cov_size = 4            # params['covariate_size'] (use_covariates=True)
    shared_hidden = 32      # params['shared_hidden_size']
    branch_out_size = shared_hidden // 2
    heads_hidden = 16       # params['heads_hidden_size']
    num_classes = 3         # params['num_classes']
    num_branches = 4        # params['num_branches']
    groups = {0: 0, 1: 1, 2: 2}   # params['groups']: id -> out-head index
    num_heads = len(set(groups.values()))
    temperature = 1.0       # branching.t

    key = jax.random.PRNGKey(0)
    ks = jax.random.split(key, 20)

    def w(k, shape, scale=0.1):
        return (scale * jax.random.normal(k, shape)).astype(jnp.float32)

    x = w(ks[0], (B, in_size), 1.0)
    cov = w(ks[1], (B, cov_size), 1.0)
    ids = np.array([0, 1, 2, 0, 1, 2, 0, 1], dtype=np.int32)

    # per-id learnable branch probabilities (positive, like torch.ones init)
    id_probs = jnp.abs(w(ks[2], (len(groups), num_branches), 1.0)) + 0.5
    branch_logits = jnp.log(id_probs)[ids]                       # (B, num_branches)
    head_idx = np.array([groups[int(i)] for i in ids], dtype=np.int32)
    head_oh = jax.nn.one_hot(head_idx, num_heads, dtype=jnp.float32)

    enc_w = w(ks[3], (in_size, ae_hidden))
    enc_b = w(ks[4], (1, ae_hidden))
    dec_w = w(ks[5], (ae_hidden, in_size))
    dec_b = w(ks[6], (1, in_size))
    br_w1a = w(ks[7], (num_branches, ae_hidden, shared_hidden))
    br_w1b = w(ks[8], (num_branches, cov_size, shared_hidden))
    br_b1 = w(ks[9], (num_branches, 1, shared_hidden))
    br_w2 = w(ks[10], (num_branches, shared_hidden, branch_out_size))
    br_b2 = w(ks[11], (num_branches, 1, branch_out_size))
    hd_w1 = w(ks[12], (num_heads, branch_out_size, heads_hidden))
    hd_b1 = w(ks[13], (num_heads, 1, heads_hidden))
    hd_w2 = w(ks[14], (num_heads, heads_hidden, num_classes))
    hd_b2 = w(ks[15], (num_heads, 1, num_classes))

    weights = (enc_w, enc_b, dec_w, dec_b,
               br_w1a, br_w1b, br_b1, br_w2, br_b2,
               hd_w1, hd_b1, hd_w2, hd_b2)

    final_out, ae_out = calm_forward(x, cov, branch_logits, head_oh, weights,
                                     temperature=temperature)
    jax.block_until_ready((final_out, ae_out))

    ref_final, ref_ae = calm_forward_ref(x, cov, branch_logits, head_oh,
                                         weights, temperature)
    # ae path is exact (no approximate ops): tight tolerance.
    np.testing.assert_allclose(np.asarray(ae_out), np.asarray(ref_ae),
                               rtol=1e-5, atol=1e-5)
    # final path goes through pl.reciprocal(approx=True) in the softmax:
    # slightly looser tolerance to cover the EUP approximation.
    np.testing.assert_allclose(np.asarray(final_out), np.asarray(ref_final),
                               rtol=5e-3, atol=5e-4)
    assert final_out.shape == (B, num_classes) and ae_out.shape == (B, in_size)
    print("KERNEL_OK")
</pallas_src>

<mosaic_0001>
module attributes {stable_mosaic.version = 11 : i64} {
  func.func @_calm_kernel(%arg0: i32, %arg1: memref<8x16xf32, #tpu.memory_space<vmem>>, %arg2: memref<8x4xf32, #tpu.memory_space<vmem>>, %arg3: memref<8x4xf32, #tpu.memory_space<vmem>>, %arg4: memref<8x3xf32, #tpu.memory_space<vmem>>, %arg5: memref<16x32xf32, #tpu.memory_space<vmem>>, %arg6: memref<1x32xf32, #tpu.memory_space<vmem>>, %arg7: memref<32x16xf32, #tpu.memory_space<vmem>>, %arg8: memref<1x16xf32, #tpu.memory_space<vmem>>, %arg9: memref<32x128xf32, #tpu.memory_space<vmem>>, %arg10: memref<4x128xf32, #tpu.memory_space<vmem>>, %arg11: memref<1x128xf32, #tpu.memory_space<vmem>>, %arg12: memref<128x16xf32, #tpu.memory_space<vmem>>, %arg13: memref<4x16xf32, #tpu.memory_space<vmem>>, %arg14: memref<4x128xf32, #tpu.memory_space<vmem>>, %arg15: memref<16x48xf32, #tpu.memory_space<vmem>>, %arg16: memref<1x48xf32, #tpu.memory_space<vmem>>, %arg17: memref<48x3xf32, #tpu.memory_space<vmem>>, %arg18: memref<3x3xf32, #tpu.memory_space<vmem>>, %arg19: memref<3x48xf32, #tpu.memory_space<vmem>>, %arg20: memref<8x3xf32, #tpu.memory_space<vmem>>, %arg21: memref<8x16xf32, #tpu.memory_space<vmem>>) attributes {dimension_semantics = [#tpu.dimension_semantics<parallel>], iteration_bounds = array<i64: 1>, scalar_prefetch = 0 : i64, scratch_operands = 0 : i64, tpu.core_type = #tpu.core_type<tc>, window_params = [{transform_indices = @transform_0, window_bounds = array<i64: 8, 16>}, {transform_indices = @transform_1, window_bounds = array<i64: 8, 4>}, {transform_indices = @transform_2, window_bounds = array<i64: 8, 4>}, {transform_indices = @transform_3, window_bounds = array<i64: 8, 3>}, {pipeline_mode = #tpu.pipeline_mode<synchronous>, transform_indices = @transform_4, window_bounds = array<i64: 16, 32>}, {pipeline_mode = #tpu.pipeline_mode<synchronous>, transform_indices = @transform_5, window_bounds = array<i64: 1, 32>}, {pipeline_mode = #tpu.pipeline_mode<synchronous>, transform_indices = @transform_6, window_bounds = array<i64: 32, 16>}, {pipeline_mode = #tpu.pipeline_mode<synchronous>, transform_indices = @transform_7, window_bounds = array<i64: 1, 16>}, {pipeline_mode = #tpu.pipeline_mode<synchronous>, transform_indices = @transform_8, window_bounds = array<i64: 32, 128>}, {pipeline_mode = #tpu.pipeline_mode<synchronous>, transform_indices = @transform_9, window_bounds = array<i64: 4, 128>}, {pipeline_mode = #tpu.pipeline_mode<synchronous>, transform_indices = @transform_10, window_bounds = array<i64: 1, 128>}, {pipeline_mode = #tpu.pipeline_mode<synchronous>, transform_indices = @transform_11, window_bounds = array<i64: 128, 16>}, {pipeline_mode = #tpu.pipeline_mode<synchronous>, transform_indices = @transform_12, window_bounds = array<i64: 4, 16>}, {pipeline_mode = #tpu.pipeline_mode<synchronous>, transform_indices = @transform_13, window_bounds = array<i64: 4, 128>}, {pipeline_mode = #tpu.pipeline_mode<synchronous>, transform_indices = @transform_14, window_bounds = array<i64: 16, 48>}, {pipeline_mode = #tpu.pipeline_mode<synchronous>, transform_indices = @transform_15, window_bounds = array<i64: 1, 48>}, {pipeline_mode = #tpu.pipeline_mode<synchronous>, transform_indices = @transform_16, window_bounds = array<i64: 48, 3>}, {pipeline_mode = #tpu.pipeline_mode<synchronous>, transform_indices = @transform_17, window_bounds = array<i64: 3, 3>}, {pipeline_mode = #tpu.pipeline_mode<synchronous>, transform_indices = @transform_18, window_bounds = array<i64: 3, 48>}, {transform_indices = @transform_19, window_bounds = array<i64: 8, 3>}, {transform_indices = @transform_20, window_bounds = array<i64: 8, 16>}]} {
    %c0 = arith.constant 0 : index
    %c0_0 = arith.constant 0 : index
    %0 = vector.load %arg1[%c0, %c0_0] : memref<8x16xf32, #tpu.memory_space<vmem>>, vector<8x16xf32>
    %c0_1 = arith.constant 0 : index
    %c0_2 = arith.constant 0 : index
    %1 = vector.load %arg2[%c0_1, %c0_2] : memref<8x4xf32, #tpu.memory_space<vmem>>, vector<8x4xf32>
    %c0_3 = arith.constant 0 : index
    %c0_4 = arith.constant 0 : index
    %2 = vector.load %arg5[%c0_3, %c0_4] : memref<16x32xf32, #tpu.memory_space<vmem>>, vector<16x32xf32>
    %cst = arith.constant dense<0.000000e+00> : vector<8x32xf32>
    %3 = tpu.matmul %0, %2, %cst {dimension_numbers = #tpu.dot_dimension_numbers<[1], [0], [0], [1], [0, 0, 1, 1], [], []>} : vector<8x16xf32>, vector<16x32xf32>, vector<8x32xf32> -> vector<8x32xf32>
    %c0_5 = arith.constant 0 : index
    %c0_6 = arith.constant 0 : index
    %4 = vector.load %arg6[%c0_5, %c0_6] : memref<1x32xf32, #tpu.memory_space<vmem>>, vector<1x32xf32>
    %5 = vector.broadcast %4 : vector<1x32xf32> to vector<8x32xf32>
    %6 = arith.addf %3, %5 : vector<8x32xf32>
    %cst_7 = arith.constant 0.000000e+00 : f32
    %7 = vector.broadcast %cst_7 : f32 to vector<8x32xf32>
    %8 = arith.maximumf %6, %7 : vector<8x32xf32>
    %c0_8 = arith.constant 0 : index
    %c0_9 = arith.constant 0 : index
    %9 = vector.load %arg7[%c0_8, %c0_9] : memref<32x16xf32, #tpu.memory_space<vmem>>, vector<32x16xf32>
    %cst_10 = arith.constant dense<0.000000e+00> : vector<8x16xf32>
    %10 = tpu.matmul %8, %9, %cst_10 {dimension_numbers = #tpu.dot_dimension_numbers<[1], [0], [0], [1], [0, 0, 1, 1], [], []>} : vector<8x32xf32>, vector<32x16xf32>, vector<8x16xf32> -> vector<8x16xf32>
    %c0_11 = arith.constant 0 : index
    %c0_12 = arith.constant 0 : index
    %11 = vector.load %arg8[%c0_11, %c0_12] : memref<1x16xf32, #tpu.memory_space<vmem>>, vector<1x16xf32>
    %12 = vector.broadcast %11 : vector<1x16xf32> to vector<8x16xf32>
    %13 = arith.addf %10, %12 : vector<8x16xf32>
    %c0_13 = arith.constant 0 : index
    %c0_14 = arith.constant 0 : index
    %14 = vector.load %arg3[%c0_13, %c0_14] : memref<8x4xf32, #tpu.memory_space<vmem>>, vector<8x4xf32>
    %cst_15 = arith.constant 1.000000e+00 : f32
    %15 = vector.broadcast %cst_15 : f32 to vector<8x4xf32>
    %16 = arith.mulf %14, %15 : vector<8x4xf32>
    %cst_16 = arith.constant dense<0xFF800000> : vector<8xf32>
    %17 = vector.multi_reduction <maximumf>, %16, %cst_16 [1] : vector<8x4xf32> to vector<8xf32>
    %18 = vector.shape_cast %17 : vector<8xf32> to vector<8x1xf32>
    %19 = vector.broadcast %18 : vector<8x1xf32> to vector<8x4xf32>
    %20 = arith.subf %16, %19 : vector<8x4xf32>
    %21 = math.exp %20 : vector<8x4xf32>
    %cst_17 = arith.constant dense<0.000000e+00> : vector<8xf32>
    %22 = vector.multi_reduction <add>, %21, %cst_17 [1] : vector<8x4xf32> to vector<8xf32>
    %23 = vector.shape_cast %22 : vector<8xf32> to vector<8x1xf32>
    %24 = tpu.reciprocal %23 {approx = true} : vector<8x1xf32> -> vector<8x1xf32>
    %25 = vector.broadcast %24 : vector<8x1xf32> to vector<8x4xf32>
    %26 = arith.mulf %21, %25 : vector<8x4xf32>
    %c0_18 = arith.constant 0 : index
    %c0_19 = arith.constant 0 : index
    %27 = vector.load %arg9[%c0_18, %c0_19] : memref<32x128xf32, #tpu.memory_space<vmem>>, vector<32x128xf32>
    %cst_20 = arith.constant dense<0.000000e+00> : vector<8x128xf32>
    %28 = tpu.matmul %8, %27, %cst_20 {dimension_numbers = #tpu.dot_dimension_numbers<[1], [0], [0], [1], [0, 0, 1, 1], [], []>} : vector<8x32xf32>, vector<32x128xf32>, vector<8x128xf32> -> vector<8x128xf32>
    %c0_21 = arith.constant 0 : index
    %c0_22 = arith.constant 0 : index
    %29 = vector.load %arg10[%c0_21, %c0_22] : memref<4x128xf32, #tpu.memory_space<vmem>>, vector<4x128xf32>
    %cst_23 = arith.constant dense<0.000000e+00> : vector<8x128xf32>
    %30 = tpu.matmul %1, %29, %cst_23 {dimension_numbers = #tpu.dot_dimension_numbers<[1], [0], [0], [1], [0, 0, 1, 1], [], []>} : vector<8x4xf32>, vector<4x128xf32>, vector<8x128xf32> -> vector<8x128xf32>
    %31 = arith.addf %28, %30 : vector<8x128xf32>
    %c0_24 = arith.constant 0 : index
    %c0_25 = arith.constant 0 : index
    %32 = vector.load %arg11[%c0_24, %c0_25] : memref<1x128xf32, #tpu.memory_space<vmem>>, vector<1x128xf32>
    %33 = vector.broadcast %32 : vector<1x128xf32> to vector<8x128xf32>
    %34 = arith.addf %31, %33 : vector<8x128xf32>
    %cst_26 = arith.constant 0.000000e+00 : f32
    %35 = vector.broadcast %cst_26 : f32 to vector<8x128xf32>
    %36 = arith.maximumf %34, %35 : vector<8x128xf32>
    %c0_27 = arith.constant 0 : index
    %c0_28 = arith.constant 0 : index
    %37 = vector.load %arg14[%c0_27, %c0_28] : memref<4x128xf32, #tpu.memory_space<vmem>>, vector<4x128xf32>
    %cst_29 = arith.constant dense<0.000000e+00> : vector<8x128xf32>
    %38 = tpu.matmul %26, %37, %cst_29 {dimension_numbers = #tpu.dot_dimension_numbers<[1], [0], [0], [1], [0, 0, 1, 1], [], []>} : vector<8x4xf32>, vector<4x128xf32>, vector<8x128xf32> -> vector<8x128xf32>
    %39 = arith.mulf %38, %36 : vector<8x128xf32>
    %c0_30 = arith.constant 0 : index
    %c0_31 = arith.constant 0 : index
    %40 = vector.load %arg12[%c0_30, %c0_31] : memref<128x16xf32, #tpu.memory_space<vmem>>, vector<128x16xf32>
    %cst_32 = arith.constant dense<0.000000e+00> : vector<8x16xf32>
    %41 = tpu.matmul %39, %40, %cst_32 {dimension_numbers = #tpu.dot_dimension_numbers<[1], [0], [0], [1], [0, 0, 1, 1], [], []>} : vector<8x128xf32>, vector<128x16xf32>, vector<8x16xf32> -> vector<8x16xf32>
    %c0_33 = arith.constant 0 : index
    %c0_34 = arith.constant 0 : index
    %42 = vector.load %arg13[%c0_33, %c0_34] : memref<4x16xf32, #tpu.memory_space<vmem>>, vector<4x16xf32>
    %cst_35 = arith.constant dense<0.000000e+00> : vector<8x16xf32>
    %43 = tpu.matmul %26, %42, %cst_35 {dimension_numbers = #tpu.dot_dimension_numbers<[1], [0], [0], [1], [0, 0, 1, 1], [], []>} : vector<8x4xf32>, vector<4x16xf32>, vector<8x16xf32> -> vector<8x16xf32>
    %44 = arith.addf %41, %43 : vector<8x16xf32>
    %c0_36 = arith.constant 0 : index
    %c0_37 = arith.constant 0 : index
    %45 = vector.load %arg4[%c0_36, %c0_37] : memref<8x3xf32, #tpu.memory_space<vmem>>, vector<8x3xf32>
    %c0_38 = arith.constant 0 : index
    %c0_39 = arith.constant 0 : index
    %46 = vector.load %arg15[%c0_38, %c0_39] : memref<16x48xf32, #tpu.memory_space<vmem>>, vector<16x48xf32>
    %cst_40 = arith.constant dense<0.000000e+00> : vector<8x48xf32>
    %47 = tpu.matmul %44, %46, %cst_40 {dimension_numbers = #tpu.dot_dimension_numbers<[1], [0], [0], [1], [0, 0, 1, 1], [], []>} : vector<8x16xf32>, vector<16x48xf32>, vector<8x48xf32> -> vector<8x48xf32>
    %c0_41 = arith.constant 0 : index
    %c0_42 = arith.constant 0 : index
    %48 = vector.load %arg16[%c0_41, %c0_42] : memref<1x48xf32, #tpu.memory_space<vmem>>, vector<1x48xf32>
    %49 = vector.broadcast %48 : vector<1x48xf32> to vector<8x48xf32>
    %50 = arith.addf %47, %49 : vector<8x48xf32>
    %cst_43 = arith.constant 0.000000e+00 : f32
    %51 = vector.broadcast %cst_43 : f32 to vector<8x48xf32>
    %52 = arith.maximumf %50, %51 : vector<8x48xf32>
    %c0_44 = arith.constant 0 : index
    %c0_45 = arith.constant 0 : index
    %53 = vector.load %arg19[%c0_44, %c0_45] : memref<3x48xf32, #tpu.memory_space<vmem>>, vector<3x48xf32>
    %cst_46 = arith.constant dense<0.000000e+00> : vector<8x48xf32>
    %54 = tpu.matmul %45, %53, %cst_46 {dimension_numbers = #tpu.dot_dimension_numbers<[1], [0], [0], [1], [0, 0, 1, 1], [], []>} : vector<8x3xf32>, vector<3x48xf32>, vector<8x48xf32> -> vector<8x48xf32>
    %55 = arith.mulf %54, %52 : vector<8x48xf32>
    %c0_47 = arith.constant 0 : index
    %c0_48 = arith.constant 0 : index
    %56 = vector.load %arg17[%c0_47, %c0_48] : memref<48x3xf32, #tpu.memory_space<vmem>>, vector<48x3xf32>
    %cst_49 = arith.constant dense<0.000000e+00> : vector<8x3xf32>
    %57 = tpu.matmul %55, %56, %cst_49 {dimension_numbers = #tpu.dot_dimension_numbers<[1], [0], [0], [1], [0, 0, 1, 1], [], []>} : vector<8x48xf32>, vector<48x3xf32>, vector<8x3xf32> -> vector<8x3xf32>
    %c0_50 = arith.constant 0 : index
    %c0_51 = arith.constant 0 : index
    %58 = vector.load %arg18[%c0_50, %c0_51] : memref<3x3xf32, #tpu.memory_space<vmem>>, vector<3x3xf32>
    %cst_52 = arith.constant dense<0.000000e+00> : vector<8x3xf32>
    %59 = tpu.matmul %45, %58, %cst_52 {dimension_numbers = #tpu.dot_dimension_numbers<[1], [0], [0], [1], [0, 0, 1, 1], [], []>} : vector<8x3xf32>, vector<3x3xf32>, vector<8x3xf32> -> vector<8x3xf32>
    %60 = arith.addf %57, %59 : vector<8x3xf32>
    %c0_53 = arith.constant 0 : index
    %c0_54 = arith.constant 0 : index
    %61 = vector.load %arg20[%c0_53, %c0_54] : memref<8x3xf32, #tpu.memory_space<vmem>>, vector<8x3xf32>
    tpu.vector_store %arg20[%c0_53, %c0_54], %60 {strides = array<i32>} : memref<8x3xf32, #tpu.memory_space<vmem>>, vector<8x3xf32>,
    %c0_55 = arith.constant 0 : index
    %c0_56 = arith.constant 0 : index
    %62 = vector.load %arg21[%c0_55, %c0_56] : memref<8x16xf32, #tpu.memory_space<vmem>>, vector<8x16xf32>
    tpu.vector_store %arg21[%c0_55, %c0_56], %13 {strides = array<i32>} : memref<8x16xf32, #tpu.memory_space<vmem>>, vector<8x16xf32>,
    return
  }
  func.func @transform_0(%arg0: i32) -> (i32, i32) {
    %c0_i32 = arith.constant 0 : i32
    %c0_i32_0 = arith.constant 0 : i32
    return %arg0, %c0_i32 : i32, i32
  }
  func.func @transform_1(%arg0: i32) -> (i32, i32) {
    %c0_i32 = arith.constant 0 : i32
    %c0_i32_0 = arith.constant 0 : i32
    return %arg0, %c0_i32 : i32, i32
  }
  func.func @transform_2(%arg0: i32) -> (i32, i32) {
    %c0_i32 = arith.constant 0 : i32
    %c0_i32_0 = arith.constant 0 : i32
    return %arg0, %c0_i32 : i32, i32
  }
  func.func @transform_3(%arg0: i32) -> (i32, i32) {
    %c0_i32 = arith.constant 0 : i32
    %c0_i32_0 = arith.constant 0 : i32
    return %arg0, %c0_i32 : i32, i32
  }
  func.func @transform_4(%arg0: i32) -> (i32, i32) {
    %c0_i32 = arith.constant 0 : i32
    %c0_i32_0 = arith.constant 0 : i32
    %c0_i32_1 = arith.constant 0 : i32
    return %c0_i32, %c0_i32_0 : i32, i32
  }
  func.func @transform_5(%arg0: i32) -> (i32, i32) {
    %c0_i32 = arith.constant 0 : i32
    %c0_i32_0 = arith.constant 0 : i32
    %c0_i32_1 = arith.constant 0 : i32
    return %c0_i32, %c0_i32_0 : i32, i32
  }
  func.func @transform_6(%arg0: i32) -> (i32, i32) {
    %c0_i32 = arith.constant 0 : i32
    %c0_i32_0 = arith.constant 0 : i32
    %c0_i32_1 = arith.constant 0 : i32
    return %c0_i32, %c0_i32_0 : i32, i32
  }
  func.func @transform_7(%arg0: i32) -> (i32, i32) {
    %c0_i32 = arith.constant 0 : i32
    %c0_i32_0 = arith.constant 0 : i32
    %c0_i32_1 = arith.constant 0 : i32
    return %c0_i32, %c0_i32_0 : i32, i32
  }
  func.func @transform_8(%arg0: i32) -> (i32, i32) {
    %c0_i32 = arith.constant 0 : i32
    %c0_i32_0 = arith.constant 0 : i32
    %c0_i32_1 = arith.constant 0 : i32
    return %c0_i32, %c0_i32_0 : i32, i32
  }
  func.func @transform_9(%arg0: i32) -> (i32, i32) {
    %c0_i32 = arith.constant 0 : i32
    %c0_i32_0 = arith.constant 0 : i32
    %c0_i32_1 = arith.constant 0 : i32
    return %c0_i32, %c0_i32_0 : i32, i32
  }
  func.func @transform_10(%arg0: i32) -> (i32, i32) {
    %c0_i32 = arith.constant 0 : i32
    %c0_i32_0 = arith.constant 0 : i32
    %c0_i32_1 = arith.constant 0 : i32
    return %c0_i32, %c0_i32_0 : i32, i32
  }
  func.func @transform_11(%arg0: i32) -> (i32, i32) {
    %c0_i32 = arith.constant 0 : i32
    %c0_i32_0 = arith.constant 0 : i32
    %c0_i32_1 = arith.constant 0 : i32
    return %c0_i32, %c0_i32_0 : i32, i32
  }
  func.func @transform_12(%arg0: i32) -> (i32, i32) {
    %c0_i32 = arith.constant 0 : i32
    %c0_i32_0 = arith.constant 0 : i32
    %c0_i32_1 = arith.constant 0 : i32
    return %c0_i32, %c0_i32_0 : i32, i32
  }
  func.func @transform_13(%arg0: i32) -> (i32, i32) {
    %c0_i32 = arith.constant 0 : i32
    %c0_i32_0 = arith.constant 0 : i32
    %c0_i32_1 = arith.constant 0 : i32
    return %c0_i32, %c0_i32_0 : i32, i32
  }
  func.func @transform_14(%arg0: i32) -> (i32, i32) {
    %c0_i32 = arith.constant 0 : i32
    %c0_i32_0 = arith.constant 0 : i32
    %c0_i32_1 = arith.constant 0 : i32
    return %c0_i32, %c0_i32_0 : i32, i32
  }
  func.func @transform_15(%arg0: i32) -> (i32, i32) {
    %c0_i32 = arith.constant 0 : i32
    %c0_i32_0 = arith.constant 0 : i32
    %c0_i32_1 = arith.constant 0 : i32
    return %c0_i32, %c0_i32_0 : i32, i32
  }
  func.func @transform_16(%arg0: i32) -> (i32, i32) {
    %c0_i32 = arith.constant 0 : i32
    %c0_i32_0 = arith.constant 0 : i32
    %c0_i32_1 = arith.constant 0 : i32
    return %c0_i32, %c0_i32_0 : i32, i32
  }
  func.func @transform_17(%arg0: i32) -> (i32, i32) {
    %c0_i32 = arith.constant 0 : i32
    %c0_i32_0 = arith.constant 0 : i32
    %c0_i32_1 = arith.constant 0 : i32
    return %c0_i32, %c0_i32_0 : i32, i32
  }
  func.func @transform_18(%arg0: i32) -> (i32, i32) {
    %c0_i32 = arith.constant 0 : i32
    %c0_i32_0 = arith.constant 0 : i32
    %c0_i32_1 = arith.constant 0 : i32
    return %c0_i32, %c0_i32_0 : i32, i32
  }
  func.func @transform_19(%arg0: i32) -> (i32, i32) {
    %c0_i32 = arith.constant 0 : i32
    %c0_i32_0 = arith.constant 0 : i32
    return %arg0, %c0_i32 : i32, i32
  }
  func.func @transform_20(%arg0: i32) -> (i32, i32) {
    %c0_i32 = arith.constant 0 : i32
    %c0_i32_0 = arith.constant 0 : i32
    return %arg0, %c0_i32 : i32, i32
  }
}

</mosaic_0001>

<llo_original>
// kernel: calm_forward.1
$region0: #{calm_forward.1}
  #allocation0 [shape = 'u32[]', space=smem, size = 0x4, offset = 0x4, fixed_abs, tag = 'smem constant byte address 0x4 - core index']
  #allocation1 [shape = 'u32[144,128]{1,0:T(1,128)}', space=vmem, size = 0x12000, scoped, tag = 'internal scratch']
  %s0 = inlined_call_operand.vmem [shape: f32[8,16], index: 0, kind: input, shape index: {}]
  %s1 = inlined_call_operand.vmem [shape: f32[8,4], index: 1, kind: input, shape index: {}]
  %s2 = inlined_call_operand.vmem [shape: f32[8,4], index: 2, kind: input, shape index: {}]
  %s3 = inlined_call_operand.vmem [shape: f32[8,3], index: 3, kind: input, shape index: {}]
  %s4 = inlined_call_operand.vmem [shape: f32[16,32], index: 4, kind: input, shape index: {}]
  %s5 = inlined_call_operand.vmem [shape: f32[1,32], index: 5, kind: input, shape index: {}]
  %s6 = inlined_call_operand.vmem [shape: f32[32,16], index: 6, kind: input, shape index: {}]
  %s7 = inlined_call_operand.vmem [shape: f32[1,16], index: 7, kind: input, shape index: {}]
  %s8 = inlined_call_operand.vmem [shape: f32[32,128], index: 8, kind: input, shape index: {}]
  %s9 = inlined_call_operand.vmem [shape: f32[4,128], index: 9, kind: input, shape index: {}]
  %s10 = inlined_call_operand.vmem [shape: f32[1,128], index: 10, kind: input, shape index: {}]
  %s11 = inlined_call_operand.vmem [shape: f32[128,16], index: 11, kind: input, shape index: {}]
  %s12 = inlined_call_operand.vmem [shape: f32[4,16], index: 12, kind: input, shape index: {}]
  %s13 = inlined_call_operand.vmem [shape: f32[4,128], index: 13, kind: input, shape index: {}]
  %s14 = inlined_call_operand.vmem [shape: f32[16,48], index: 14, kind: input, shape index: {}]
  %s15 = inlined_call_operand.vmem [shape: f32[1,48], index: 15, kind: input, shape index: {}]
  %s16 = inlined_call_operand.vmem [shape: f32[48,3], index: 16, kind: input, shape index: {}]
  %s17 = inlined_call_operand.vmem [shape: f32[3,3], index: 17, kind: input, shape index: {}]
  %s18 = inlined_call_operand.vmem [shape: f32[3,48], index: 18, kind: input, shape index: {}]
  %s19 = inlined_call_operand.vmem [shape: f32[8,3], index: 19, kind: output, shape index: {0}]
  %s20 = inlined_call_operand.hbm [shape: f32[8,16], index: 20, kind: output, shape index: {1}]
  %21 = xla_tuple %s19, %s20
  %s22 = sld [smem:[#allocation0]]
  $region94: #{calm_forward.1} parent=0
    _
  %s24 = ssub.s32 1, %s22
  %s25 = scalar_select 0, %s24, %s22
  $region1: #{calm_forward.1} parent=0
    #allocation2 [shape = 'u8[4096]{0}', space=vmem, size = 0x1000, scoped, tag = 'output window, operand 1, single buffered']
    #allocation3 [shape = 's32[1]{0}', space=sflag, size = 0x4, scoped, tag = 'scoped memory for calm_forward.1']
    %26 = vsyncpa [#allocation3], 0
    // Predicated region
    $region2: #{calm_forward.1} parent=1 // pred_check
      _
    $region3: #{calm_forward.1} parent=1 // pred_check_branch
      %28 = sbr.rel (0) target = $region5
    $region4: #{calm_forward.1} parent=1 // pred_region
      _
    $region5: #{calm_forward.1} parent=1 // pred_fallthru
      _
    // Predicated region
    $region6: #{calm_forward.1} parent=1 // pred_check
      _
    $region7: #{calm_forward.1} parent=1 // pred_check_branch
      %30 = sbr.rel (0) target = $region9
    $region8: #{calm_forward.1} parent=1 // pred_region
      _
    $region9: #{calm_forward.1} parent=1 // pred_fallthru
      _
    // Predicated region
    $region10: #{calm_forward.1} parent=1 // pred_check
      _
    $region11: #{calm_forward.1} parent=1 // pred_check_branch
      %32 = sbr.rel (0) target = $region13
    $region12: #{calm_forward.1} parent=1 // pred_region
      _
    $region13: #{calm_forward.1} parent=1 // pred_fallthru
      _
    // Predicated region
    $region14: #{calm_forward.1} parent=1 // pred_check
      _
    $region15: #{calm_forward.1} parent=1 // pred_check_branch
      %34 = sbr.rel (0) target = $region17
    $region16: #{calm_forward.1} parent=1 // pred_region
      _
    $region17: #{calm_forward.1} parent=1 // pred_fallthru
      _
    // Predicated region
    $region18: #{calm_forward.1} parent=1 // pred_check
      _
    $region19: #{calm_forward.1} parent=1 // pred_check_branch
      %36 = sbr.rel (0) target = $region21
    $region20: #{calm_forward.1} parent=1 // pred_region
      _
    $region21: #{calm_forward.1} parent=1 // pred_fallthru
      _
    // Predicated region
    $region22: #{calm_forward.1} parent=1 // pred_check
      _
    $region23: #{calm_forward.1} parent=1 // pred_check_branch
      %38 = sbr.rel (0) target = $region25
    $region24: #{calm_forward.1} parent=1 // pred_region
      _
    $region25: #{calm_forward.1} parent=1 // pred_fallthru
      _
    // Predicated region
    $region26: #{calm_forward.1} parent=1 // pred_check
      _
    $region27: #{calm_forward.1} parent=1 // pred_check_branch
      %40 = sbr.rel (0) target = $region29
    $region28: #{calm_forward.1} parent=1 // pred_region
      _
    $region29: #{calm_forward.1} parent=1 // pred_fallthru
      _
    // Predicated region
    $region30: #{calm_forward.1} parent=1 // pred_check
      _
    $region31: #{calm_forward.1} parent=1 // pred_check_branch
      %42 = sbr.rel (0) target = $region33
    $region32: #{calm_forward.1} parent=1 // pred_region
      _
    $region33: #{calm_forward.1} parent=1 // pred_fallthru
      _
    // Predicated region
    $region34: #{calm_forward.1} parent=1 // pred_check
      _
    $region35: #{calm_forward.1} parent=1 // pred_check_branch
      %44 = sbr.rel (0) target = $region37
    $region36: #{calm_forward.1} parent=1 // pred_region
      _
    $region37: #{calm_forward.1} parent=1 // pred_fallthru
      _
    // Predicated region
    $region38: #{calm_forward.1} parent=1 // pred_check
      _
    $region39: #{calm_forward.1} parent=1 // pred_check_branch
      %46 = sbr.rel (0) target = $region41
    $region40: #{calm_forward.1} parent=1 // pred_region
      _
    $region41: #{calm_forward.1} parent=1 // pred_fallthru
      _
    // Predicated region
    $region42: #{calm_forward.1} parent=1 // pred_check
      _
    $region43: #{calm_forward.1} parent=1 // pred_check_branch
      %48 = sbr.rel (0) target = $region45
    $region44: #{calm_forward.1} parent=1 // pred_region
      _
    $region45: #{calm_forward.1} parent=1 // pred_fallthru
      _
    // Predicated region
    $region46: #{calm_forward.1} parent=1 // pred_check
      _
    $region47: #{calm_forward.1} parent=1 // pred_check_branch
      %50 = sbr.rel (0) target = $region49
    $region48: #{calm_forward.1} parent=1 // pred_region
      _
    $region49: #{calm_forward.1} parent=1 // pred_fallthru
      _
    // Predicated region
    $region50: #{calm_forward.1} parent=1 // pred_check
      _
    $region51: #{calm_forward.1} parent=1 // pred_check_branch
      %52 = sbr.rel (0) target = $region53
    $region52: #{calm_forward.1} parent=1 // pred_region
      _
    $region53: #{calm_forward.1} parent=1 // pred_fallthru
      _
    // Predicated region
    $region54: #{calm_forward.1} parent=1 // pred_check
      _
    $region55: #{calm_forward.1} parent=1 // pred_check_branch
      %54 = sbr.rel (0) target = $region57
    $region56: #{calm_forward.1} parent=1 // pred_region
      _
    $region57: #{calm_forward.1} parent=1 // pred_fallthru
      _
    // Predicated region
    $region58: #{calm_forward.1} parent=1 // pred_check
      _
    $region59: #{calm_forward.1} parent=1 // pred_check_branch
      %56 = sbr.rel (0) target = $region61
    $region60: #{calm_forward.1} parent=1 // pred_region
      _
    $region61: #{calm_forward.1} parent=1 // pred_fallthru
      _
    // Predicated region
    $region62: #{calm_forward.1} parent=1 // pred_check
      _
    $region63: #{calm_forward.1} parent=1 // pred_check_branch
      %58 = sbr.rel (0) target = $region65
    $region64: #{calm_forward.1} parent=1 // pred_region
      _
    $region65: #{calm_forward.1} parent=1 // pred_fallthru
      _
    // Predicated region
    $region66: #{calm_forward.1} parent=1 // pred_check
      _
    $region67: #{calm_forward.1} parent=1 // pred_check_branch
      %60 = sbr.rel (0) target = $region69
    $region68: #{calm_forward.1} parent=1 // pred_region
      _
    $region69: #{calm_forward.1} parent=1 // pred_fallthru
      _
    // Predicated region
    $region70: #{calm_forward.1} parent=1 // pred_check
      _
    $region71: #{calm_forward.1} parent=1 // pred_check_branch
      %62 = sbr.rel (0) target = $region73
    $region72: #{calm_forward.1} parent=1 // pred_region
      _
    $region73: #{calm_forward.1} parent=1 // pred_fallthru
      _
    // Predicated region
    $region74: #{calm_forward.1} parent=1 // pred_check
      _
    $region75: #{calm_forward.1} parent=1 // pred_check_branch
      %64 = sbr.rel (0) target = $region77
    $region76: #{calm_forward.1} parent=1 // pred_region
      _
    $region77: #{calm_forward.1} parent=1 // pred_fallthru
      _
    %v65 = vld [vmem:[%s0] sm:$0xff]
    %v66 = vld [vmem:[%s1] sm:$0xff]
    %v67 = vld [vmem:[%s4] sm:$0xff]
    %v68 = vld [vmem:[%s4 + $0x8] sm:$0xff]
    %v69 = vld [vmem:[%s5] sm:$0x1]
    %v71 = vlaneseq
    %v72 = vshrl.u32 %v71, 7
    %v73 = vsub.s32 0, %v72
    %v74 = vrot.slane %v69, %v73
    %vm76 = vcmask 130048
    %v78 = vsel %vm76, %v65, 0
    %80 = vmatprep.subr.mxu0 0.0
    %81 = vmatpush1.msra.mxu0 0.0
    %82 = vmatprep.subr.mxu0 0.0
    %83 = vmatpush1.msra.mxu0 0.0
    %84 = vmatprep.subr.mxu0 0.0
    %85 = vmatpush1.msra.mxu0 0.0
    %86 = vmatprep.subr.mxu0 0.0
    %87 = vmatpush1.msra.mxu0 0.0
    %88 = vmatprep.subr.mxu0 0.0
    %89 = vmatpush1.msra.mxu0 0.0
    %90 = vmatprep.subr.mxu0 0.0
    %91 = vmatpush1.msra.mxu0 0.0
    %92 = vmatprep.subr.mxu0 0.0
    %93 = vmatpush1.msra.mxu0 0.0
    %94 = vmatprep.subr.mxu0 0.0
    %95 = vmatpush1.msra.mxu0 0.0
    %96 = vmatprep.subr.mxu0 0.0
    %97 = vmatpush1.msra.mxu0 0.0
    %98 = vmatprep.subr.mxu0 0.0
    %99 = vmatpush1.msra.mxu0 0.0
    %100 = vmatprep.subr.mxu0 0.0
    %101 = vmatpush1.msra.mxu0 0.0
    %102 = vmatprep.subr.mxu0 0.0
    %103 = vmatpush1.msra.mxu0 0.0
    %104 = vmatprep.subr.mxu0 0.0
    %105 = vmatpush1.msra.mxu0 0.0
    %106 = vmatprep.subr.mxu0 0.0
    %107 = vmatpush1.msra.mxu0 0.0
    %108 = vmatprep.subr.mxu0 0.0
    %109 = vmatpush1.msra.mxu0 %v68
    %110 = vmatprep.subr.mxu0 0.0
    %111 = vmatpush1.msra.mxu0 %v67
    %112 = vmatprep.subr.mxu0 0.0
    %113 = vmatpush2.msra.mxu0 0.0
    %114 = vmatprep.subr.mxu0 0.0
    %115 = vmatpush2.msra.mxu0 0.0
    %116 = vmatprep.subr.mxu0 0.0
    %117 = vmatpush2.msra.mxu0 0.0
    %118 = vmatprep.subr.mxu0 0.0
    %119 = vmatpush2.msra.mxu0 0.0
    %120 = vmatprep.subr.mxu0 0.0
    %121 = vmatpush2.msra.mxu0 0.0
    %122 = vmatprep.subr.mxu0 0.0
    %123 = vmatpush2.msra.mxu0 0.0
    %124 = vmatprep.subr.mxu0 0.0
    %125 = vmatpush2.msra.mxu0 0.0
    %126 = vmatprep.subr.mxu0 0.0
    %127 = vmatpush2.msra.mxu0 0.0
    %128 = vmatprep.subr.mxu0 0.0
    %129 = vmatpush2.msra.mxu0 0.0
    %130 = vmatprep.subr.mxu0 0.0
    %131 = vmatpush2.msra.mxu0 0.0
    %132 = vmatprep.subr.mxu0 0.0
    %133 = vmatpush2.msra.mxu0 0.0
    %134 = vmatprep.subr.mxu0 0.0
    %135 = vmatpush2.msra.mxu0 0.0
    %136 = vmatprep.subr.mxu0 0.0
    %137 = vmatpush2.msra.mxu0 0.0
    %138 = vmatprep.subr.mxu0 0.0
    %139 = vmatpush2.msra.mxu0 0.0
    %140 = vmatprep.subr.mxu0 0.0
    %141 = vmatpush2.msra.mxu0 0.0
    %142 = vmatprep.subr.mxu0 0.0
    %143 = vmatpush2.msra.mxu0 0.0
    %144 = vmatprep.mubr.f32.mxu0 0.0
    %145 = vmatmul.mubr.f32.gmra.mxu0 %v78
    %v146 = vpop.f32.mrf.mxu0
    %v147 = vadd.f32 %v74, %v146
    %v148 = vpop.f32.mrf.mxu0
    %149 = vdwg.mxu0
    %v150 = vmax.f32 %v147, 0.0
    %v151 = vld [vmem:[%s6] sm:$0xff]
    %v152 = vld [vmem:[%s6 + $0x8] sm:$0xff]
    %v153 = vld [vmem:[%s6 + $0x10] sm:$0xff]
    %v154 = vld [vmem:[%s6 + $0x18] sm:$0xff]
    %v155 = vld [vmem:[%s7] sm:$0x1]
    %v157 = vlaneseq
    %v158 = vshrl.u32 %v157, 7
    %v159 = vsub.s32 0, %v158
    %v160 = vrot.slane %v155, %v159
    %vm162 = vcmask 261120
    %v164 = vsel %vm162, %v150, 0
    %166 = vmatprep.subr.mxu0 0.0
    %167 = vmatpush1.msra.mxu0 0.0
    %168 = vmatprep.subr.mxu0 0.0
    %169 = vmatpush1.msra.mxu0 0.0
    %170 = vmatprep.subr.mxu0 0.0
    %171 = vmatpush1.msra.mxu0 0.0
    %172 = vmatprep.subr.mxu0 0.0
    %173 = vmatpush1.msra.mxu0 0.0
    %174 = vmatprep.subr.mxu0 0.0
    %175 = vmatpush1.msra.mxu0 0.0
    %176 = vmatprep.subr.mxu0 0.0
    %177 = vmatpush1.msra.mxu0 0.0
    %178 = vmatprep.subr.mxu0 0.0
    %179 = vmatpush1.msra.mxu0 0.0
    %180 = vmatprep.subr.mxu0 0.0
    %181 = vmatpush1.msra.mxu0 0.0
    %182 = vmatprep.subr.mxu0 0.0
    %183 = vmatpush1.msra.mxu0 0.0
    %184 = vmatprep.subr.mxu0 0.0
    %185 = vmatpush1.msra.mxu0 0.0
    %186 = vmatprep.subr.mxu0 0.0
    %187 = vmatpush1.msra.mxu0 0.0
    %188 = vmatprep.subr.mxu0 0.0
    %189 = vmatpush1.msra.mxu0 0.0
    %190 = vmatprep.subr.mxu0 0.0
    %191 = vmatpush1.msra.mxu0 %v154
    %192 = vmatprep.subr.mxu0 0.0
    %193 = vmatpush1.msra.mxu0 %v153
    %194 = vmatprep.subr.mxu0 0.0
    %195 = vmatpush1.msra.mxu0 %v152
    %196 = vmatprep.subr.mxu0 0.0
    %197 = vmatpush1.msra.mxu0 %v151
    %198 = vmatprep.subr.mxu0 0.0
    %199 = vmatpush2.msra.mxu0 0.0
    %200 = vmatprep.subr.mxu0 0.0
    %201 = vmatpush2.msra.mxu0 0.0
    %202 = vmatprep.subr.mxu0 0.0
    %203 = vmatpush2.msra.mxu0 0.0
    %204 = vmatprep.subr.mxu0 0.0
    %205 = vmatpush2.msra.mxu0 0.0
    %206 = vmatprep.subr.mxu0 0.0
    %207 = vmatpush2.msra.mxu0 0.0
    %208 = vmatprep.subr.mxu0 0.0
    %209 = vmatpush2.msra.mxu0 0.0
    %210 = vmatprep.subr.mxu0 0.0
    %211 = vmatpush2.msra.mxu0 0.0
    %212 = vmatprep.subr.mxu0 0.0
    %213 = vmatpush2.msra.mxu0 0.0
    %214 = vmatprep.subr.mxu0 0.0
    %215 = vmatpush2.msra.mxu0 0.0
    %216 = vmatprep.subr.mxu0 0.0
    %217 = vmatpush2.msra.mxu0 0.0
    %218 = vmatprep.subr.mxu0 0.0
    %219 = vmatpush2.msra.mxu0 0.0
    %220 = vmatprep.subr.mxu0 0.0
    %221 = vmatpush2.msra.mxu0 0.0
    %222 = vmatprep.subr.mxu0 0.0
    %223 = vmatpush2.msra.mxu0 0.0
    %224 = vmatprep.subr.mxu0 0.0
    %225 = vmatpush2.msra.mxu0 0.0
    %226 = vmatprep.subr.mxu0 0.0
    %227 = vmatpush2.msra.mxu0 0.0
    %228 = vmatprep.subr.mxu0 0.0
    %229 = vmatpush2.msra.mxu0 0.0
    %230 = vmatprep.mubr.f32.mxu0 0.0
    %231 = vmatmul.mubr.f32.gmra.mxu0 %v164
    %v232 = vpop.f32.mrf.mxu0
    %v233 = vadd.f32 %v160, %v232
    %v234 = vpop.f32.mrf.mxu0
    %235 = vdwg.mxu0
    %v236 = vld [vmem:[%s2] sm:$0xff]
    %vm237 = vcmask 31744
    %v238 = vsel %vm237, %v236, -inf
    %239 = vmax.xlane.f32.xlu0 %v238
    %v240 = vpop.xlane.xlu0 %239
    %v241 = vsub.f32 %v236, %v240
    %v242 = vmul.f32 %v241, 1.442695
    %v243 = vpow.pop %v242
    %v244 = vsel %vm237, %v243, 0.0
    %245 = vadd.xlane.f32.xlu0 %v244
    %v246 = vpop.xlane.xlu0 %245
    %v247 = vrcp.pop %v246
    %v248 = vmul.f32 %v243, %v247
    %v249 = vld [vmem:[%s8] sm:$0xff]
    %v250 = vld [vmem:[%s8 + $0x8] sm:$0xff]
    %v251 = vld [vmem:[%s8 + $0x10] sm:$0xff]
    %v252 = vld [vmem:[%s8 + $0x18] sm:$0xff]
    %v253 = vld [vmem:[%s9] sm:$0xf]
    %v255 = vsel %vm237, %v66, 0
    %vm257 = vcmask 1043456
    %v259 = vsel %vm257, %v253, 0
    %261 = vmatprep.subr.mxu0 0.0
    %262 = vmatpush1.msra.mxu0 0.0
    %263 = vmatprep.subr.mxu0 0.0
    %264 = vmatpush1.msra.mxu0 0.0
    %265 = vmatprep.subr.mxu0 0.0
    %266 = vmatpush1.msra.mxu0 0.0
    %267 = vmatprep.subr.mxu0 0.0
    %268 = vmatpush1.msra.mxu0 0.0
    %269 = vmatprep.subr.mxu0 0.0
    %270 = vmatpush1.msra.mxu0 0.0
    %271 = vmatprep.subr.mxu0 0.0
    %272 = vmatpush1.msra.mxu0 0.0
    %273 = vmatprep.subr.mxu0 0.0
    %274 = vmatpush1.msra.mxu0 0.0
    %275 = vmatprep.subr.mxu0 0.0
    %276 = vmatpush1.msra.mxu0 0.0
    %277 = vmatprep.subr.mxu0 0.0
    %278 = vmatpush1.msra.mxu0 0.0
    %279 = vmatprep.subr.mxu0 0.0
    %280 = vmatpush1.msra.mxu0 0.0
    %281 = vmatprep.subr.mxu0 0.0
    %282 = vmatpush1.msra.mxu0 0.0
    %283 = vmatprep.subr.mxu0 0.0
    %284 = vmatpush1.msra.mxu0 0.0
    %285 = vmatprep.subr.mxu0 0.0
    %286 = vmatpush1.msra.mxu0 0.0
    %287 = vmatprep.subr.mxu0 0.0
    %288 = vmatpush1.msra.mxu0 0.0
    %289 = vmatprep.subr.mxu0 0.0
    %290 = vmatpush1.msra.mxu0 0.0
    %291 = vmatprep.subr.mxu0 0.0
    %292 = vmatpush1.msra.mxu0 %v259
    %293 = vmatprep.subr.mxu0 0.0
    %294 = vmatpush2.msra.mxu0 0.0
    %295 = vmatprep.subr.mxu0 0.0
    %296 = vmatpush2.msra.mxu0 0.0
    %297 = vmatprep.subr.mxu0 0.0
    %298 = vmatpush2.msra.mxu0 0.0
    %299 = vmatprep.subr.mxu0 0.0
    %300 = vmatpush2.msra.mxu0 0.0
    %301 = vmatprep.subr.mxu0 0.0
    %302 = vmatpush2.msra.mxu0 0.0
    %303 = vmatprep.subr.mxu0 0.0
    %304 = vmatpush2.msra.mxu0 0.0
    %305 = vmatprep.subr.mxu0 0.0
    %306 = vmatpush2.msra.mxu0 0.0
    %307 = vmatprep.subr.mxu0 0.0
    %308 = vmatpush2.msra.mxu0 0.0
    %309 = vmatprep.subr.mxu0 0.0
    %310 = vmatpush2.msra.mxu0 0.0
    %311 = vmatprep.subr.mxu0 0.0
    %312 = vmatpush2.msra.mxu0 0.0
    %313 = vmatprep.subr.mxu0 0.0
    %314 = vmatpush2.msra.mxu0 0.0
    %315 = vmatprep.subr.mxu0 0.0
    %316 = vmatpush2.msra.mxu0 0.0
    %317 = vmatprep.subr.mxu0 0.0
    %318 = vmatpush2.msra.mxu0 0.0
    %319 = vmatprep.subr.mxu0 0.0
    %320 = vmatpush2.msra.mxu0 0.0
    %321 = vmatprep.subr.mxu0 0.0
    %322 = vmatpush2.msra.mxu0 0.0
    %323 = vmatprep.subr.mxu0 0.0
    %324 = vmatpush2.msra.mxu0 0.0
    %325 = vmatprep.mubr.f32.mxu0 0.0
    %326 = vmatmul.mubr.f32.gmra.mxu0 %v255
    %v327 = vpop.f32.mrf.mxu0
    %v328 = vadd.f32 0.0, %v327
    %v329 = vpop.f32.mrf.mxu0
    %330 = vdwg.mxu0
    %331 = vmatprep.subr.mxu0 0.0
    %332 = vmatpush1.msra.mxu0 0.0
    %333 = vmatprep.subr.mxu0 0.0
    %334 = vmatpush1.msra.mxu0 0.0
    %335 = vmatprep.subr.mxu0 0.0
    %336 = vmatpush1.msra.mxu0 0.0
    %337 = vmatprep.subr.mxu0 0.0
    %338 = vmatpush1.msra.mxu0 0.0
    %339 = vmatprep.subr.mxu0 0.0
    %340 = vmatpush1.msra.mxu0 0.0
    %341 = vmatprep.subr.mxu0 0.0
    %342 = vmatpush1.msra.mxu0 0.0
    %343 = vmatprep.subr.mxu0 0.0
    %344 = vmatpush1.msra.mxu0 0.0
    %345 = vmatprep.subr.mxu0 0.0
    %346 = vmatpush1.msra.mxu0 0.0
    %347 = vmatprep.subr.mxu0 0.0
    %348 = vmatpush1.msra.mxu0 0.0
    %349 = vmatprep.subr.mxu0 0.0
    %350 = vmatpush1.msra.mxu0 0.0
    %351 = vmatprep.subr.mxu0 0.0
    %352 = vmatpush1.msra.mxu0 0.0
    %353 = vmatprep.subr.mxu0 0.0
    %354 = vmatpush1.msra.mxu0 0.0
    %355 = vmatprep.subr.mxu0 0.0
    %356 = vmatpush1.msra.mxu0 %v252
    %357 = vmatprep.subr.mxu0 0.0
    %358 = vmatpush1.msra.mxu0 %v251
    %359 = vmatprep.subr.mxu0 0.0
    %360 = vmatpush1.msra.mxu0 %v250
    %361 = vmatprep.subr.mxu0 0.0
    %362 = vmatpush1.msra.mxu0 %v249
    %363 = vmatprep.subr.mxu0 0.0
    %364 = vmatpush2.msra.mxu0 0.0
    %365 = vmatprep.subr.mxu0 0.0
    %366 = vmatpush2.msra.mxu0 0.0
    %367 = vmatprep.subr.mxu0 0.0
    %368 = vmatpush2.msra.mxu0 0.0
    %369 = vmatprep.subr.mxu0 0.0
    %370 = vmatpush2.msra.mxu0 0.0
    %371 = vmatprep.subr.mxu0 0.0
    %372 = vmatpush2.msra.mxu0 0.0
    %373 = vmatprep.subr.mxu0 0.0
    %374 = vmatpush2.msra.mxu0 0.0
    %375 = vmatprep.subr.mxu0 0.0
    %376 = vmatpush2.msra.mxu0 0.0
    %377 = vmatprep.subr.mxu0 0.0
    %378 = vmatpush2.msra.mxu0 0.0
    %379 = vmatprep.subr.mxu0 0.0
    %380 = vmatpush2.msra.mxu0 0.0
    %381 = vmatprep.subr.mxu0 0.0
    %382 = vmatpush2.msra.mxu0 0.0
    %383 = vmatprep.subr.mxu0 0.0
    %384 = vmatpush2.msra.mxu0 0.0
    %385 = vmatprep.subr.mxu0 0.0
    %386 = vmatpush2.msra.mxu0 0.0
    %387 = vmatprep.subr.mxu0 0.0
    %388 = vmatpush2.msra.mxu0 0.0
    %389 = vmatprep.subr.mxu0 0.0
    %390 = vmatpush2.msra.mxu0 0.0
    %391 = vmatprep.subr.mxu0 0.0
    %392 = vmatpush2.msra.mxu0 0.0
    %393 = vmatprep.subr.mxu0 0.0
    %394 = vmatpush2.msra.mxu0 0.0
    %395 = vmatprep.mubr.f32.mxu0 0.0
    %396 = vmatmul.mubr.f32.gmra.mxu0 %v164
    %v397 = vpop.f32.mrf.mxu0
    %v398 = vadd.f32 %v328, %v397
    %v399 = vpop.f32.mrf.mxu0
    %400 = vdwg.mxu0
    %v401 = vld [vmem:[%s10] sm:$0x1]
    %v403 = vlaneseq
    %v404 = vshrl.u32 %v403, 7
    %v405 = vsub.s32 0, %v404
    %v406 = vrot.slane %v401, %v405
    %v408 = vadd.f32 %v398, %v406
    %v409 = vmax.f32 %v408, 0.0
    %v410 = vld [vmem:[%s13] sm:$0xf]
    %v412 = vsel %vm237, %v248, 0
    %v415 = vsel %vm257, %v410, 0
    %417 = vmatprep.subr.mxu0 0.0
    %418 = vmatpush1.msra.mxu0 0.0
    %419 = vmatprep.subr.mxu0 0.0
    %420 = vmatpush1.msra.mxu0 0.0
    %421 = vmatprep.subr.mxu0 0.0
    %422 = vmatpush1.msra.mxu0 0.0
    %423 = vmatprep.subr.mxu0 0.0
    %424 = vmatpush1.msra.mxu0 0.0
    %425 = vmatprep.subr.mxu0 0.0
    %426 = vmatpush1.msra.mxu0 0.0
    %427 = vmatprep.subr.mxu0 0.0
    %428 = vmatpush1.msra.mxu0 0.0
    %429 = vmatprep.subr.mxu0 0.0
    %430 = vmatpush1.msra.mxu0 0.0
    %431 = vmatprep.subr.mxu0 0.0
    %432 = vmatpush1.msra.mxu0 0.0
    %433 = vmatprep.subr.mxu0 0.0
    %434 = vmatpush1.msra.mxu0 0.0
    %435 = vmatprep.subr.mxu0 0.0
    %436 = vmatpush1.msra.mxu0 0.0
    %437 = vmatprep.subr.mxu0 0.0
    %438 = vmatpush1.msra.mxu0 0.0
    %439 = vmatprep.subr.mxu0 0.0
    %440 = vmatpush1.msra.mxu0 0.0
    %441 = vmatprep.subr.mxu0 0.0
    %442 = vmatpush1.msra.mxu0 0.0
    %443 = vmatprep.subr.mxu0 0.0
    %444 = vmatpush1.msra.mxu0 0.0
    %445 = vmatprep.subr.mxu0 0.0
    %446 = vmatpush1.msra.mxu0 0.0
    %447 = vmatprep.subr.mxu0 0.0
    %448 = vmatpush1.msra.mxu0 %v415
    %449 = vmatprep.subr.mxu0 0.0
    %450 = vmatpush2.msra.mxu0 0.0
    %451 = vmatprep.subr.mxu0 0.0
    %452 = vmatpush2.msra.mxu0 0.0
    %453 = vmatprep.subr.mxu0 0.0
    %454 = vmatpush2.msra.mxu0 0.0
    %455 = vmatprep.subr.mxu0 0.0
    %456 = vmatpush2.msra.mxu0 0.0
    %457 = vmatprep.subr.mxu0 0.0
    %458 = vmatpush2.msra.mxu0 0.0
    %459 = vmatprep.subr.mxu0 0.0
    %460 = vmatpush2.msra.mxu0 0.0
    %461 = vmatprep.subr.mxu0 0.0
    %462 = vmatpush2.msra.mxu0 0.0
    %463 = vmatprep.subr.mxu0 0.0
    %464 = vmatpush2.msra.mxu0 0.0
    %465 = vmatprep.subr.mxu0 0.0
    %466 = vmatpush2.msra.mxu0 0.0
    %467 = vmatprep.subr.mxu0 0.0
    %468 = vmatpush2.msra.mxu0 0.0
    %469 = vmatprep.subr.mxu0 0.0
    %470 = vmatpush2.msra.mxu0 0.0
    %471 = vmatprep.subr.mxu0 0.0
    %472 = vmatpush2.msra.mxu0 0.0
    %473 = vmatprep.subr.mxu0 0.0
    %474 = vmatpush2.msra.mxu0 0.0
    %475 = vmatprep.subr.mxu0 0.0
    %476 = vmatpush2.msra.mxu0 0.0
    %477 = vmatprep.subr.mxu0 0.0
    %478 = vmatpush2.msra.mxu0 0.0
    %479 = vmatprep.subr.mxu0 0.0
    %480 = vmatpush2.msra.mxu0 0.0
    %481 = vmatprep.mubr.f32.mxu0 0.0
    %482 = vmatmul.mubr.f32.gmra.mxu0 %v412
    %v483 = vpop.f32.mrf.mxu0
    %v484 = vadd.f32 0.0, %v483
    %v485 = vpop.f32.mrf.mxu0
    %486 = vdwg.mxu0
    %v487 = vmul.f32 %v484, %v409
    %v488 = vld [vmem:[%s11] sm:$0xff]
    %v489 = vld [vmem:[%s11 + $0x8] sm:$0xff]
    %v490 = vld [vmem:[%s11 + $0x10] sm:$0xff]
    %v491 = vld [vmem:[%s11 + $0x18] sm:$0xff]
    %v492 = vld [vmem:[%s11 + $0x20] sm:$0xff]
    %v493 = vld [vmem:[%s11 + $0x28] sm:$0xff]
    %v494 = vld [vmem:[%s11 + $0x30] sm:$0xff]
    %v495 = vld [vmem:[%s11 + $0x38] sm:$0xff]
    %v496 = vld [vmem:[%s11 + $0x40] sm:$0xff]
    %v497 = vld [vmem:[%s11 + $0x48] sm:$0xff]
    %v498 = vld [vmem:[%s11 + $0x50] sm:$0xff]
    %v499 = vld [vmem:[%s11 + $0x58] sm:$0xff]
    %v500 = vld [vmem:[%s11 + $0x60] sm:$0xff]
    %v501 = vld [vmem:[%s11 + $0x68] sm:$0xff]
    %v502 = vld [vmem:[%s11 + $0x70] sm:$0xff]
    %v503 = vld [vmem:[%s11 + $0x78] sm:$0xff]
    %v504 = vld [vmem:[%s12] sm:$0xf]
    %v506 = vsel %vm257, %v504, 0
    %508 = vmatprep.subr.mxu0 0.0
    %509 = vmatpush1.msra.mxu0 0.0
    %510 = vmatprep.subr.mxu0 0.0
    %511 = vmatpush1.msra.mxu0 0.0
    %512 = vmatprep.subr.mxu0 0.0
    %513 = vmatpush1.msra.mxu0 0.0
    %514 = vmatprep.subr.mxu0 0.0
    %515 = vmatpush1.msra.mxu0 0.0
    %516 = vmatprep.subr.mxu0 0.0
    %517 = vmatpush1.msra.mxu0 0.0
    %518 = vmatprep.subr.mxu0 0.0
    %519 = vmatpush1.msra.mxu0 0.0
    %520 = vmatprep.subr.mxu0 0.0
    %521 = vmatpush1.msra.mxu0 0.0
    %522 = vmatprep.subr.mxu0 0.0
    %523 = vmatpush1.msra.mxu0 0.0
    %524 = vmatprep.subr.mxu0 0.0
    %525 = vmatpush1.msra.mxu0 0.0
    %526 = vmatprep.subr.mxu0 0.0
    %527 = vmatpush1.msra.mxu0 0.0
    %528 = vmatprep.subr.mxu0 0.0
    %529 = vmatpush1.msra.mxu0 0.0
    %530 = vmatprep.subr.mxu0 0.0
    %531 = vmatpush1.msra.mxu0 0.0
    %532 = vmatprep.subr.mxu0 0.0
    %533 = vmatpush1.msra.mxu0 0.0
    %534 = vmatprep.subr.mxu0 0.0
    %535 = vmatpush1.msra.mxu0 0.0
    %536 = vmatprep.subr.mxu0 0.0
    %537 = vmatpush1.msra.mxu0 0.0
    %538 = vmatprep.subr.mxu0 0.0
    %539 = vmatpush1.msra.mxu0 %v506
    %540 = vmatprep.subr.mxu0 0.0
    %541 = vmatpush2.msra.mxu0 0.0
    %542 = vmatprep.subr.mxu0 0.0
    %543 = vmatpush2.msra.mxu0 0.0
    %544 = vmatprep.subr.mxu0 0.0
    %545 = vmatpush2.msra.mxu0 0.0
    %546 = vmatprep.subr.mxu0 0.0
    %547 = vmatpush2.msra.mxu0 0.0
    %548 = vmatprep.subr.mxu0 0.0
    %549 = vmatpush2.msra.mxu0 0.0
    %550 = vmatprep.subr.mxu0 0.0
    %551 = vmatpush2.msra.mxu0 0.0
    %552 = vmatprep.subr.mxu0 0.0
    %553 = vmatpush2.msra.mxu0 0.0
    %554 = vmatprep.subr.mxu0 0.0
    %555 = vmatpush2.msra.mxu0 0.0
    %556 = vmatprep.subr.mxu0 0.0
    %557 = vmatpush2.msra.mxu0 0.0
    %558 = vmatprep.subr.mxu0 0.0
    %559 = vmatpush2.msra.mxu0 0.0
    %560 = vmatprep.subr.mxu0 0.0
    %561 = vmatpush2.msra.mxu0 0.0
    %562 = vmatprep.subr.mxu0 0.0
    %563 = vmatpush2.msra.mxu0 0.0
    %564 = vmatprep.subr.mxu0 0.0
    %565 = vmatpush2.msra.mxu0 0.0
    %566 = vmatprep.subr.mxu0 0.0
    %567 = vmatpush2.msra.mxu0 0.0
    %568 = vmatprep.subr.mxu0 0.0
    %569 = vmatpush2.msra.mxu0 0.0
    %570 = vmatprep.subr.mxu0 0.0
    %571 = vmatpush2.msra.mxu0 0.0
    %572 = vmatprep.mubr.f32.mxu0 0.0
    %573 = vmatmul.mubr.f32.gmra.mxu0 %v412
    %v574 = vpop.f32.mrf.mxu0
    %v575 = vadd.f32 0.0, %v574
    %v576 = vpop.f32.mrf.mxu0
    %577 = vdwg.mxu0
    %578 = vmatprep.subr.mxu0 0.0
    %579 = vmatpush1.msra.mxu0 %v503
    %580 = vmatprep.subr.mxu0 0.0
    %581 = vmatpush1.msra.mxu0 %v502
    %582 = vmatprep.subr.mxu0 0.0
    %583 = vmatpush1.msra.mxu0 %v501
    %584 = vmatprep.subr.mxu0 0.0
    %585 = vmatpush1.msra.mxu0 %v500
    %586 = vmatprep.subr.mxu0 0.0
    %587 = vmatpush1.msra.mxu0 %v499
    %588 = vmatprep.subr.mxu0 0.0
    %589 = vmatpush1.msra.mxu0 %v498
    %590 = vmatprep.subr.mxu0 0.0
    %591 = vmatpush1.msra.mxu0 %v497
    %592 = vmatprep.subr.mxu0 0.0
    %593 = vmatpush1.msra.mxu0 %v496
    %594 = vmatprep.subr.mxu0 0.0
    %595 = vmatpush1.msra.mxu0 %v495
    %596 = vmatprep.subr.mxu0 0.0
    %597 = vmatpush1.msra.mxu0 %v494
    %598 = vmatprep.subr.mxu0 0.0
    %599 = vmatpush1.msra.mxu0 %v493
    %600 = vmatprep.subr.mxu0 0.0
    %601 = vmatpush1.msra.mxu0 %v492
    %602 = vmatprep.subr.mxu0 0.0
    %603 = vmatpush1.msra.mxu0 %v491
    %604 = vmatprep.subr.mxu0 0.0
    %605 = vmatpush1.msra.mxu0 %v490
    %606 = vmatprep.subr.mxu0 0.0
    %607 = vmatpush1.msra.mxu0 %v489
    %608 = vmatprep.subr.mxu0 0.0
    %609 = vmatpush1.msra.mxu0 %v488
    %610 = vmatprep.subr.mxu0 0.0
    %611 = vmatpush2.msra.mxu0 0.0
    %612 = vmatprep.subr.mxu0 0.0
    %613 = vmatpush2.msra.mxu0 0.0
    %614 = vmatprep.subr.mxu0 0.0
    %615 = vmatpush2.msra.mxu0 0.0
    %616 = vmatprep.subr.mxu0 0.0
    %617 = vmatpush2.msra.mxu0 0.0
    %618 = vmatprep.subr.mxu0 0.0
    %619 = vmatpush2.msra.mxu0 0.0
    %620 = vmatprep.subr.mxu0 0.0
    %621 = vmatpush2.msra.mxu0 0.0
    %622 = vmatprep.subr.mxu0 0.0
    %623 = vmatpush2.msra.mxu0 0.0
    %624 = vmatprep.subr.mxu0 0.0
    %625 = vmatpush2.msra.mxu0 0.0
    %626 = vmatprep.subr.mxu0 0.0
    %627 = vmatpush2.msra.mxu0 0.0
    %628 = vmatprep.subr.mxu0 0.0
    %629 = vmatpush2.msra.mxu0 0.0
    %630 = vmatprep.subr.mxu0 0.0
    %631 = vmatpush2.msra.mxu0 0.0
    %632 = vmatprep.subr.mxu0 0.0
    %633 = vmatpush2.msra.mxu0 0.0
    %634 = vmatprep.subr.mxu0 0.0
    %635 = vmatpush2.msra.mxu0 0.0
    %636 = vmatprep.subr.mxu0 0.0
    %637 = vmatpush2.msra.mxu0 0.0
    %638 = vmatprep.subr.mxu0 0.0
    %639 = vmatpush2.msra.mxu0 0.0
    %640 = vmatprep.subr.mxu0 0.0
    %641 = vmatpush2.msra.mxu0 0.0
    %642 = vmatprep.mubr.f32.mxu0 0.0
    %643 = vmatmul.mubr.f32.gmra.mxu0 %v487
    %v644 = vpop.f32.mrf.mxu0
    %v645 = vadd.f32 %v575, %v644
    %v646 = vpop.f32.mrf.mxu0
    %647 = vdwg.mxu0
    %v648 = vld [vmem:[%s3] sm:$0xff]
    %v649 = vld [vmem:[%s14] sm:$0xff]
    %v650 = vld [vmem:[%s14 + $0x8] sm:$0xff]
    %v651 = vld [vmem:[%s15] sm:$0x1]
    %v653 = vlaneseq
    %v654 = vshrl.u32 %v653, 7
    %v655 = vsub.s32 0, %v654
    %v656 = vrot.slane %v651, %v655
    %v659 = vsel %vm76, %v645, 0
    %661 = vmatprep.subr.mxu0 0.0
    %662 = vmatpush1.msra.mxu0 0.0
    %663 = vmatprep.subr.mxu0 0.0
    %664 = vmatpush1.msra.mxu0 0.0
    %665 = vmatprep.subr.mxu0 0.0
    %666 = vmatpush1.msra.mxu0 0.0
    %667 = vmatprep.subr.mxu0 0.0
    %668 = vmatpush1.msra.mxu0 0.0
    %669 = vmatprep.subr.mxu0 0.0
    %670 = vmatpush1.msra.mxu0 0.0
    %671 = vmatprep.subr.mxu0 0.0
    %672 = vmatpush1.msra.mxu0 0.0
    %673 = vmatprep.subr.mxu0 0.0
    %674 = vmatpush1.msra.mxu0 0.0
    %675 = vmatprep.subr.mxu0 0.0
    %676 = vmatpush1.msra.mxu0 0.0
    %677 = vmatprep.subr.mxu0 0.0
    %678 = vmatpush1.msra.mxu0 0.0
    %679 = vmatprep.subr.mxu0 0.0
    %680 = vmatpush1.msra.mxu0 0.0
    %681 = vmatprep.subr.mxu0 0.0
    %682 = vmatpush1.msra.mxu0 0.0
    %683 = vmatprep.subr.mxu0 0.0
    %684 = vmatpush1.msra.mxu0 0.0
    %685 = vmatprep.subr.mxu0 0.0
    %686 = vmatpush1.msra.mxu0 0.0
    %687 = vmatprep.subr.mxu0 0.0
    %688 = vmatpush1.msra.mxu0 0.0
    %689 = vmatprep.subr.mxu0 0.0
    %690 = vmatpush1.msra.mxu0 %v650
    %691 = vmatprep.subr.mxu0 0.0
    %692 = vmatpush1.msra.mxu0 %v649
    %693 = vmatprep.subr.mxu0 0.0
    %694 = vmatpush2.msra.mxu0 0.0
    %695 = vmatprep.subr.mxu0 0.0
    %696 = vmatpush2.msra.mxu0 0.0
    %697 = vmatprep.subr.mxu0 0.0
    %698 = vmatpush2.msra.mxu0 0.0
    %699 = vmatprep.subr.mxu0 0.0
    %700 = vmatpush2.msra.mxu0 0.0
    %701 = vmatprep.subr.mxu0 0.0
    %702 = vmatpush2.msra.mxu0 0.0
    %703 = vmatprep.subr.mxu0 0.0
    %704 = vmatpush2.msra.mxu0 0.0
    %705 = vmatprep.subr.mxu0 0.0
    %706 = vmatpush2.msra.mxu0 0.0
    %707 = vmatprep.subr.mxu0 0.0
    %708 = vmatpush2.msra.mxu0 0.0
    %709 = vmatprep.subr.mxu0 0.0
    %710 = vmatpush2.msra.mxu0 0.0
    %711 = vmatprep.subr.mxu0 0.0
    %712 = vmatpush2.msra.mxu0 0.0
    %713 = vmatprep.subr.mxu0 0.0
    %714 = vmatpush2.msra.mxu0 0.0
    %715 = vmatprep.subr.mxu0 0.0
    %716 = vmatpush2.msra.mxu0 0.0
    %717 = vmatprep.subr.mxu0 0.0
    %718 = vmatpush2.msra.mxu0 0.0
    %719 = vmatprep.subr.mxu0 0.0
    %720 = vmatpush2.msra.mxu0 0.0
    %721 = vmatprep.subr.mxu0 0.0
    %722 = vmatpush2.msra.mxu0 0.0
    %723 = vmatprep.subr.mxu0 0.0
    %724 = vmatpush2.msra.mxu0 0.0
    %725 = vmatprep.mubr.f32.mxu0 0.0
    %726 = vmatmul.mubr.f32.gmra.mxu0 %v659
    %v727 = vpop.f32.mrf.mxu0
    %v728 = vadd.f32 %v656, %v727
    %v729 = vpop.f32.mrf.mxu0
    %730 = vdwg.mxu0
    %v731 = vmax.f32 %v728, 0.0
    %v732 = vld [vmem:[%s18] sm:$0x7]
    %vm733 = vcmask 23552
    %v735 = vsel %vm733, %v648, 0
    %vm737 = vcmask 1042432
    %v739 = vsel %vm737, %v732, 0
    %741 = vmatprep.subr.mxu0 0.0
    %742 = vmatpush1.msra.mxu0 0.0
    %743 = vmatprep.subr.mxu0 0.0
    %744 = vmatpush1.msra.mxu0 0.0
    %745 = vmatprep.subr.mxu0 0.0
    %746 = vmatpush1.msra.mxu0 0.0
    %747 = vmatprep.subr.mxu0 0.0
    %748 = vmatpush1.msra.mxu0 0.0
    %749 = vmatprep.subr.mxu0 0.0
    %750 = vmatpush1.msra.mxu0 0.0
    %751 = vmatprep.subr.mxu0 0.0
    %752 = vmatpush1.msra.mxu0 0.0
    %753 = vmatprep.subr.mxu0 0.0
    %754 = vmatpush1.msra.mxu0 0.0
    %755 = vmatprep.subr.mxu0 0.0
    %756 = vmatpush1.msra.mxu0 0.0
    %757 = vmatprep.subr.mxu0 0.0
    %758 = vmatpush1.msra.mxu0 0.0
    %759 = vmatprep.subr.mxu0 0.0
    %760 = vmatpush1.msra.mxu0 0.0
    %761 = vmatprep.subr.mxu0 0.0
    %762 = vmatpush1.msra.mxu0 0.0
    %763 = vmatprep.subr.mxu0 0.0
    %764 = vmatpush1.msra.mxu0 0.0
    %765 = vmatprep.subr.mxu0 0.0
    %766 = vmatpush1.msra.mxu0 0.0
    %767 = vmatprep.subr.mxu0 0.0
    %768 = vmatpush1.msra.mxu0 0.0
    %769 = vmatprep.subr.mxu0 0.0
    %770 = vmatpush1.msra.mxu0 0.0
    %771 = vmatprep.subr.mxu0 0.0
    %772 = vmatpush1.msra.mxu0 %v739
    %773 = vmatprep.subr.mxu0 0.0
    %774 = vmatpush2.msra.mxu0 0.0
    %775 = vmatprep.subr.mxu0 0.0
    %776 = vmatpush2.msra.mxu0 0.0
    %777 = vmatprep.subr.mxu0 0.0
    %778 = vmatpush2.msra.mxu0 0.0
    %779 = vmatprep.subr.mxu0 0.0
    %780 = vmatpush2.msra.mxu0 0.0
    %781 = vmatprep.subr.mxu0 0.0
    %782 = vmatpush2.msra.mxu0 0.0
    %783 = vmatprep.subr.mxu0 0.0
    %784 = vmatpush2.msra.mxu0 0.0
    %785 = vmatprep.subr.mxu0 0.0
    %786 = vmatpush2.msra.mxu0 0.0
    %787 = vmatprep.subr.mxu0 0.0
    %788 = vmatpush2.msra.mxu0 0.0
    %789 = vmatprep.subr.mxu0 0.0
    %790 = vmatpush2.msra.mxu0 0.0
    %791 = vmatprep.subr.mxu0 0.0
    %792 = vmatpush2.msra.mxu0 0.0
    %793 = vmatprep.subr.mxu0 0.0
    %794 = vmatpush2.msra.mxu0 0.0
    %795 = vmatprep.subr.mxu0 0.0
    %796 = vmatpush2.msra.mxu0 0.0
    %797 = vmatprep.subr.mxu0 0.0
    %798 = vmatpush2.msra.mxu0 0.0
    %799 = vmatprep.subr.mxu0 0.0
    %800 = vmatpush2.msra.mxu0 0.0
    %801 = vmatprep.subr.mxu0 0.0
    %802 = vmatpush2.msra.mxu0 0.0
    %803 = vmatprep.subr.mxu0 0.0
    %804 = vmatpush2.msra.mxu0 0.0
    %805 = vmatprep.mubr.f32.mxu0 0.0
    %806 = vmatmul.mubr.f32.gmra.mxu0 %v735
    %v807 = vpop.f32.mrf.mxu0
    %v808 = vadd.f32 0.0, %v807
    %v809 = vpop.f32.mrf.mxu0
    %810 = vdwg.mxu0
    %v811 = vmul.f32 %v808, %v731
    %v812 = vld [vmem:[%s16] sm:$0xff]
    %v813 = vld [vmem:[%s16 + $0x8] sm:$0xff]
    %v814 = vld [vmem:[%s16 + $0x10] sm:$0xff]
    %v815 = vld [vmem:[%s16 + $0x18] sm:$0xff]
    %v816 = vld [vmem:[%s16 + $0x20] sm:$0xff]
    %v817 = vld [vmem:[%s16 + $0x28] sm:$0xff]
    %v818 = vld [vmem:[%s17] sm:$0x7]
    %v820 = vsel %vm737, %v818, 0
    %822 = vmatprep.subr.mxu0 0.0
    %823 = vmatpush1.msra.mxu0 0.0
    %824 = vmatprep.subr.mxu0 0.0
    %825 = vmatpush1.msra.mxu0 0.0
    %826 = vmatprep.subr.mxu0 0.0
    %827 = vmatpush1.msra.mxu0 0.0
    %828 = vmatprep.subr.mxu0 0.0
    %829 = vmatpush1.msra.mxu0 0.0
    %830 = vmatprep.subr.mxu0 0.0
    %831 = vmatpush1.msra.mxu0 0.0
    %832 = vmatprep.subr.mxu0 0.0
    %833 = vmatpush1.msra.mxu0 0.0
    %834 = vmatprep.subr.mxu0 0.0
    %835 = vmatpush1.msra.mxu0 0.0
    %836 = vmatprep.subr.mxu0 0.0
    %837 = vmatpush1.msra.mxu0 0.0
    %838 = vmatprep.subr.mxu0 0.0
    %839 = vmatpush1.msra.mxu0 0.0
    %840 = vmatprep.subr.mxu0 0.0
    %841 = vmatpush1.msra.mxu0 0.0
    %842 = vmatprep.subr.mxu0 0.0
    %843 = vmatpush1.msra.mxu0 0.0
    %844 = vmatprep.subr.mxu0 0.0
    %845 = vmatpush1.msra.mxu0 0.0
    %846 = vmatprep.subr.mxu0 0.0
    %847 = vmatpush1.msra.mxu0 0.0
    %848 = vmatprep.subr.mxu0 0.0
    %849 = vmatpush1.msra.mxu0 0.0
    %850 = vmatprep.subr.mxu0 0.0
    %851 = vmatpush1.msra.mxu0 0.0
    %852 = vmatprep.subr.mxu0 0.0
    %853 = vmatpush1.msra.mxu0 %v820
    %854 = vmatprep.subr.mxu0 0.0
    %855 = vmatpush2.msra.mxu0 0.0
    %856 = vmatprep.subr.mxu0 0.0
    %857 = vmatpush2.msra.mxu0 0.0
    %858 = vmatprep.subr.mxu0 0.0
    %859 = vmatpush2.msra.mxu0 0.0
    %860 = vmatprep.subr.mxu0 0.0
    %861 = vmatpush2.msra.mxu0 0.0
    %862 = vmatprep.subr.mxu0 0.0
    %863 = vmatpush2.msra.mxu0 0.0
    %864 = vmatprep.subr.mxu0 0.0
    %865 = vmatpush2.msra.mxu0 0.0
    %866 = vmatprep.subr.mxu0 0.0
    %867 = vmatpush2.msra.mxu0 0.0
    %868 = vmatprep.subr.mxu0 0.0
    %869 = vmatpush2.msra.mxu0 0.0
    %870 = vmatprep.subr.mxu0 0.0
    %871 = vmatpush2.msra.mxu0 0.0
    %872 = vmatprep.subr.mxu0 0.0
    %873 = vmatpush2.msra.mxu0 0.0
    %874 = vmatprep.subr.mxu0 0.0
    %875 = vmatpush2.msra.mxu0 0.0
    %876 = vmatprep.subr.mxu0 0.0
    %877 = vmatpush2.msra.mxu0 0.0
    %878 = vmatprep.subr.mxu0 0.0
    %879 = vmatpush2.msra.mxu0 0.0
    %880 = vmatprep.subr.mxu0 0.0
    %881 = vmatpush2.msra.mxu0 0.0
    %882 = vmatprep.subr.mxu0 0.0
    %883 = vmatpush2.msra.mxu0 0.0
    %884 = vmatprep.subr.mxu0 0.0
    %885 = vmatpush2.msra.mxu0 0.0
    %886 = vmatprep.mubr.f32.mxu0 0.0
    %887 = vmatmul.mubr.f32.gmra.mxu0 %v735
    %v888 = vpop.f32.mrf.mxu0
    %v889 = vadd.f32 0.0, %v888
    %v890 = vpop.f32.mrf.mxu0
    %891 = vdwg.mxu0
    %vm892 = vcmask 392192
    %v894 = vsel %vm892, %v811, 0
    %896 = vmatprep.subr.mxu0 0.0
    %897 = vmatpush1.msra.mxu0 0.0
    %898 = vmatprep.subr.mxu0 0.0
    %899 = vmatpush1.msra.mxu0 0.0
    %900 = vmatprep.subr.mxu0 0.0
    %901 = vmatpush1.msra.mxu0 0.0
    %902 = vmatprep.subr.mxu0 0.0
    %903 = vmatpush1.msra.mxu0 0.0
    %904 = vmatprep.subr.mxu0 0.0
    %905 = vmatpush1.msra.mxu0 0.0
    %906 = vmatprep.subr.mxu0 0.0
    %907 = vmatpush1.msra.mxu0 0.0
    %908 = vmatprep.subr.mxu0 0.0
    %909 = vmatpush1.msra.mxu0 0.0
    %910 = vmatprep.subr.mxu0 0.0
    %911 = vmatpush1.msra.mxu0 0.0
    %912 = vmatprep.subr.mxu0 0.0
    %913 = vmatpush1.msra.mxu0 0.0
    %914 = vmatprep.subr.mxu0 0.0
    %915 = vmatpush1.msra.mxu0 0.0
    %916 = vmatprep.subr.mxu0 0.0
    %917 = vmatpush1.msra.mxu0 %v817
    %918 = vmatprep.subr.mxu0 0.0
    %919 = vmatpush1.msra.mxu0 %v816
    %920 = vmatprep.subr.mxu0 0.0
    %921 = vmatpush1.msra.mxu0 %v815
    %922 = vmatprep.subr.mxu0 0.0
    %923 = vmatpush1.msra.mxu0 %v814
    %924 = vmatprep.subr.mxu0 0.0
    %925 = vmatpush1.msra.mxu0 %v813
    %926 = vmatprep.subr.mxu0 0.0
    %927 = vmatpush1.msra.mxu0 %v812
    %928 = vmatprep.subr.mxu0 0.0
    %929 = vmatpush2.msra.mxu0 0.0
    %930 = vmatprep.subr.mxu0 0.0
    %931 = vmatpush2.msra.mxu0 0.0
    %932 = vmatprep.subr.mxu0 0.0
    %933 = vmatpush2.msra.mxu0 0.0
    %934 = vmatprep.subr.mxu0 0.0
    %935 = vmatpush2.msra.mxu0 0.0
    %936 = vmatprep.subr.mxu0 0.0
    %937 = vmatpush2.msra.mxu0 0.0
    %938 = vmatprep.subr.mxu0 0.0
    %939 = vmatpush2.msra.mxu0 0.0
    %940 = vmatprep.subr.mxu0 0.0
    %941 = vmatpush2.msra.mxu0 0.0
    %942 = vmatprep.subr.mxu0 0.0
    %943 = vmatpush2.msra.mxu0 0.0
    %944 = vmatprep.subr.mxu0 0.0
    %945 = vmatpush2.msra.mxu0 0.0
    %946 = vmatprep.subr.mxu0 0.0
    %947 = vmatpush2.msra.mxu0 0.0
    %948 = vmatprep.subr.mxu0 0.0
    %949 = vmatpush2.msra.mxu0 0.0
    %950 = vmatprep.subr.mxu0 0.0
    %951 = vmatpush2.msra.mxu0 0.0
    %952 = vmatprep.subr.mxu0 0.0
    %953 = vmatpush2.msra.mxu0 0.0
    %954 = vmatprep.subr.mxu0 0.0
    %955 = vmatpush2.msra.mxu0 0.0
    %956 = vmatprep.subr.mxu0 0.0
    %957 = vmatpush2.msra.mxu0 0.0
    %958 = vmatprep.subr.mxu0 0.0
    %959 = vmatpush2.msra.mxu0 0.0
    %960 = vmatprep.mubr.f32.mxu0 0.0
    %961 = vmatmul.mubr.f32.gmra.mxu0 %v894
    %v962 = vpop.f32.mrf.mxu0
    %v963 = vadd.f32 %v889, %v962
    %v964 = vpop.f32.mrf.mxu0
    %965 = vdwg.mxu0
    %966 = vst.msk [vmem:[%s19] sm:$0xff] %vm733, %v963
    %967 = vst.msk [vmem:[#allocation2] sm:$0xff] %vm76, %v233
    // Predicated region
    $region78: #{calm_forward.1} parent=1 // pred_check
      _
    $region79: #{calm_forward.1} parent=1 // pred_check_branch
      %969 = sbr.rel (0) target = $region81
    $region80: #{calm_forward.1} parent=1 // pred_region
      _
    $region81: #{calm_forward.1} parent=1 // pred_fallthru
      _
    // Predicated region
    $region82: #{calm_forward.1} parent=1 // pred_check
      _
    $region83: #{calm_forward.1} parent=1 // pred_check_branch
      %971 = sbr.rel (0) target = $region85
    $region84: #{calm_forward.1} parent=1 // pred_region
      %s973 = ssub.s32 128, 128
      %974 = vsyncadd [#allocation3], %s973
      %s976 = sshll.u32 [#allocation2], 4
      %s977 = int_to_ptr.vmem [resolvable:$true] %s976
      %979 = dma.vmem_to_hbm [thread:$0]  %s977, 128, %s20, [#allocation3]
    $region85: #{calm_forward.1} parent=1 // pred_fallthru
      _
    // Predicated region
    $region86: #{calm_forward.1} parent=1 // pred_check
      _
    $region87: #{calm_forward.1} parent=1 // pred_check_branch
      %981 = sbr.rel (0) target = $region89
    $region88: #{calm_forward.1} parent=1 // pred_region
      _
    $region89: #{calm_forward.1} parent=1 // pred_fallthru
      _
    // Predicated region
    $region90: #{calm_forward.1} parent=1 // pred_check
      _
    $region91: #{calm_forward.1} parent=1 // pred_check_branch
      %983 = sbr.rel (0) target = $region93
    $region92: #{calm_forward.1} parent=1 // pred_region
      %984 = dma.done [#allocation3], 128
    $region93: #{calm_forward.1} parent=1 // pred_fallthru
      _
    %985 = vsyncpa [#allocation3], 1

</llo_original>
